<compile_context>
chip_gen: v7x
topology: tpu7x:2x2x1
jax: 0.10.0
libtpu: 0.0.40
codegen_flags: <defaults>
</compile_context>

<pallas_src>
import math
import numpy as np
import jax
import jax.numpy as jnp
from jax.experimental import pallas as pl
from jax.experimental.pallas import tpu as pltpu


# --------------------------------------------------------------------------
# Kernel
# --------------------------------------------------------------------------
def data_embedding_kernel(x_ref, w_ref, pe_ref, o_ref):
    """Fused TokenEmbedding (k=3 circular conv) + PositionalEmbedding add.

    x_ref : (TB*L, C)  rows ordered [batch-major, length-minor]  (fast path)
            or (1, L, C)                                          (fallback)
    w_ref : (3, C, D)  taps 0/1/2 = prev / cur / next (torch w[d,c,k] -> [k,c,d])
    pe_ref: (L, D)     positional-embedding table, f32 (fetched once)
    o_ref : (TB, L, D)
    """
    tb, L, D = o_ref.shape
    x = x_ref[0] if x_ref.ndim == 3 else x_ref[...]
    R, C = x.shape                                    # R == tb * L

    if L > 1:
        # Circular shift of every length-L segment by +/-1, computed on the
        # whole block at once: a global rank-2 roll is correct everywhere
        # except the first/last row of each segment, which are patched in
        # from a second roll with a select.  tpu rotate is a 32-bit XLU op,
        # so sub-32-bit inputs do the (tiny, C-lane-wide) shifts at 32 bit.
        xs = x if x.dtype.itemsize == 4 else x.astype(jnp.float32)
        g_prev = pltpu.roll(xs, 1, axis=0)                       # row r-1
        g_next = pltpu.roll(xs, R - 1, axis=0)                   # row r+1
        wrap_prev = pltpu.roll(xs, (R - (L - 1)) % R, axis=0)    # row r+L-1
        wrap_next = pltpu.roll(xs, (L - 1) % R, axis=0)          # row r-L+1
        l_idx = jax.lax.broadcasted_iota(jnp.int32, (tb, L, C), 1).reshape(R, C)
        x_prev = jnp.where(l_idx == 0, wrap_prev, g_prev).astype(x.dtype)
        x_next = jnp.where(l_idx == L - 1, wrap_next, g_next).astype(x.dtype)
    else:
        x_prev = x
        x_next = x

    # Three K=C matmuls with f32 accumulation (one batched MXU problem per
    # grid step, no per-batch unroll).
    acc = jnp.dot(x_prev, w_ref[0], preferred_element_type=jnp.float32)
    acc = acc + jnp.dot(x, w_ref[1], preferred_element_type=jnp.float32)
    acc = acc + jnp.dot(x_next, w_ref[2], preferred_element_type=jnp.float32)

    # Fused DataEmbedding epilogue: positional embedding add (dropout is the
    # identity in eval mode) -> single lane-dense store, no extra HBM pass.
    out = acc.reshape(tb, L, D) + pe_ref[...]
    o_ref[...] = out.astype(o_ref.dtype)


# --------------------------------------------------------------------------
# Tiling / VMEM planning
# --------------------------------------------------------------------------
def _rup(v, m):
    return ((v + m - 1) // m) * m


def _sublane_rows(dtype):
    # rows per sublane tile: 8 (f32), 16 (bf16), 32 (int8/fp8)
    return max(8, 32 // np.dtype(dtype).itemsize)


def _device_vmem_plan():
    """Returns (vmem_budget_for_tiling, vmem_limit_bytes, min_grid_steps)."""
    vmem_cap = None
    try:
        info = pltpu.get_tpu_info()
        vmem_cap = int(getattr(info, "vmem_capacity_bytes", 0)) or None
    except Exception:
        vmem_cap = None
    if vmem_cap is None:
        # Unknown generation: size for the smallest (v7x-class) VMEM.
        return 20 << 20, 32 << 20, 4
    if vmem_cap <= (64 << 20):
        # v7x-class: 64 MiB per TensorCore, 2 TCs per chip -> smaller tiles
        # and >= 4 grid steps so each core gets >= 2 pipelined steps.
        return 24 << 20, 32 << 20, 4
    # v5e / v6e: 128 MiB physical VMEM; raise the scoped limit explicitly and
    # use large blocks to amortize the ~0.35us per-grid-step overhead.
    return 48 << 20, 64 << 20, 2


def _pick_batch_tile(B, L, C, D, x_dtype, w_dtype, out_dtype,
                     vmem_budget, min_steps):
    """Largest per-step batch tile TB whose lane/sublane-padded,
    double-buffered VMEM footprint fits the budget while leaving
    >= min_steps grid steps when the batch size allows it."""
    x_it = np.dtype(x_dtype).itemsize
    w_it = np.dtype(w_dtype).itemsize
    o_it = np.dtype(out_dtype).itemsize
    Cp, Dp = _rup(C, 128), _rup(D, 128)
    Lx = _rup(L, _sublane_rows(x_dtype))
    Lo = _rup(L, _sublane_rows(out_dtype))
    L32 = _rup(L, 8)

    # per batch element: double-buffered in/out blocks + in-kernel
    # intermediates (rolled/selected copies + iota at 32 bit, f32 accumulator)
    per_b = (2 * Lx * Cp * x_it
             + 2 * Lo * Dp * o_it
             + 2 * L32 * Dp * 4
             + 8 * L32 * Cp * 4)
    # grid-invariant tiles (weights + positional embedding), double-buffered
    fixed = (2 * 3 * _rup(C, _sublane_rows(w_dtype)) * Dp * w_it
             + 2 * L32 * Dp * 4)

    tb = max(1, (vmem_budget - fixed) // per_b)
    tb = min(tb, B)
    if B >= min_steps:
        tb = min(tb, max(1, -(-B // min_steps)))
        while tb > 1 and -(-B // tb) < min_steps:
            tb -= 1
    return int(tb)


# --------------------------------------------------------------------------
# Wrapper
# --------------------------------------------------------------------------
def positional_embedding(L, d_model, dtype=jnp.float32):
    """Matches PyTorch PositionalEmbedding (sin on even, cos on odd cols)."""
    position = jnp.arange(L, dtype=jnp.float32)[:, None]
    div_term = jnp.exp(jnp.arange(0, d_model, 2, dtype=jnp.float32)
                       * (-(math.log(10000.0) / d_model)))
    pe = jnp.zeros((L, d_model), jnp.float32)
    pe = pe.at[:, 0::2].set(jnp.sin(position * div_term))
    pe = pe.at[:, 1::2].set(jnp.cos(position * div_term)[:, : d_model // 2])
    return pe.astype(dtype)


def informer_data_embedding(x, w_taps, *, pe=None, out_dtype=None):
    """Fused Informer DataEmbedding forward (eval mode).

    x      : (B, L, c_in)
    w_taps : (3, c_in, d_model) with w_taps[k, c, d] = torch_conv_weight[d, c, k]
    pe     : optional (L, d_model) positional table (computed if None)
    Returns (B, L, d_model) in out_dtype (defaults to x.dtype).
    """
    B, L, C = x.shape
    k, Cw, D = w_taps.shape
    assert k == 3 and Cw == C
    out_dtype = np.dtype(out_dtype) if out_dtype is not None else np.dtype(x.dtype)

    if pe is None:
        pe = positional_embedding(L, D)
    pe = pe.astype(jnp.float32)
    w = w_taps.astype(x.dtype)

    budget, vmem_limit, min_steps = _device_vmem_plan()

    # Fast path flattens (B, L) -> rows so each grid step is one batched
    # matmul; requires L aligned to the sublane tile so the in-kernel
    # (rows,) <-> (tb, L) reshapes are layout no-ops.
    row_align = max(8, _sublane_rows(x.dtype), _sublane_rows(out_dtype))
    fast = (L % row_align == 0)

    if fast:
        tb = _pick_batch_tile(B, L, C, D, x.dtype, w.dtype, out_dtype,
                              budget, min_steps)
        x_in = x.reshape(B * L, C)            # free, metadata-only reshape
        x_spec = pl.BlockSpec((tb * L, C), lambda i: (i, 0))
    else:
        # TODO(synk): unaligned-L path keeps TB=1 (still correct, just smaller blocks).
        tb = 1
        x_in = x
        x_spec = pl.BlockSpec((1, L, C), lambda i: (i, 0, 0))

    grid = (pl.cdiv(B, tb),)

    cost = pl.CostEstimate(
        flops=2 * B * L * 3 * C * D,
        transcendentals=0,
        bytes_accessed=int(x.size * x.dtype.itemsize
                           + w.size * np.dtype(w.dtype).itemsize
                           + pe.size * 4
                           + B * L * D * out_dtype.itemsize),
    )

    return pl.pallas_call(
        data_embedding_kernel,
        out_shape=jax.ShapeDtypeStruct((B, L, D), out_dtype),
        grid_spec=pltpu.PrefetchScalarGridSpec(
            num_scalar_prefetch=0,
            grid=grid,
            in_specs=[
                x_spec,
                # weight / pe tiles are tiny and grid-invariant (index map is
                # constant, so they are DMA'd once and kept resident)
                pl.BlockSpec((3, C, D), lambda i: (0, 0, 0)),
                pl.BlockSpec((L, D), lambda i: (0, 0)),
            ],
            out_specs=pl.BlockSpec((tb, L, D), lambda i: (i, 0, 0)),
        ),
        compiler_params=pltpu.CompilerParams(
            dimension_semantics=("parallel",),
            vmem_limit_bytes=vmem_limit),
        cost_estimate=cost,
    )(x_in, w, pe)


# --------------------------------------------------------------------------
# Reference + weight init (matches nn.Conv1d kaiming_normal_ fan_in/leaky_relu)
# --------------------------------------------------------------------------
def make_weights(key, c_in, d_model):
    fan_in = c_in * 3
    gain = (2.0 / (1.0 + 0.01 ** 2)) ** 0.5
    std = gain / (fan_in ** 0.5)
    w_torch_layout = jax.random.normal(key, (d_model, c_in, 3),
                                       dtype=jnp.float32) * std
    return jnp.transpose(w_torch_layout, (2, 1, 0))   # (3, c_in, d_model)


def reference(x, w_taps, pe):
    x_prev = jnp.roll(x, 1, axis=1)
    x_next = jnp.roll(x, -1, axis=1)
    tok = (jnp.einsum("blc,cd->bld", x_prev, w_taps[0])
           + jnp.einsum("blc,cd->bld", x, w_taps[1])
           + jnp.einsum("blc,cd->bld", x_next, w_taps[2]))
    return tok + pe[None]


# --------------------------------------------------------------------------
# Demo / self-test
# --------------------------------------------------------------------------
if __name__ == "__main__":
    key = jax.random.PRNGKey(0)
    k_x, k_w1, k_w2, k_w3 = jax.random.split(key, 4)

    # Test 1: Informer-ish small config; B=5 exercises the cdiv (masked-tail)
    # grid, c_in=7 a lane-unaligned channel count, d_model=32 (< 128 lanes).
    B, L, c_in, d_model = 5, 16, 7, 32
    x = jax.random.normal(k_x, (B, L, c_in), dtype=jnp.float32)
    w1 = make_weights(k_w1, c_in, d_model)
    pe1 = positional_embedding(L, d_model)
    out1 = jax.block_until_ready(informer_data_embedding(x, w1, pe=pe1))
    ref1 = reference(x, w1, pe1)
    assert out1.shape == (B, L, d_model)
    assert jnp.allclose(out1, ref1, atol=1e-4, rtol=1e-4)

    # Test 2: lane-dense d_model (multiple of 128), divisible batch.
    B2, d2 = 8, 128
    x2 = jax.random.normal(k_x, (B2, L, c_in), dtype=jnp.float32)
    w2 = make_weights(k_w2, c_in, d2)
    pe2 = positional_embedding(L, d2)
    out2 = jax.block_until_ready(informer_data_embedding(x2, w2, pe=pe2))
    assert out2.shape == (B2, L, d2)
    assert jnp.allclose(out2, reference(x2, w2, pe2), atol=1e-4, rtol=1e-4)

    # Test 3: bf16 in/out (halves HBM traffic on a purely mem-bound op),
    # f32 accumulation inside the kernel.
    d3 = 64
    w3 = make_weights(k_w3, c_in, d3)
    pe3 = positional_embedding(L, d3)
    x_bf16 = x.astype(jnp.bfloat16)
    w_bf16 = w3.astype(jnp.bfloat16)
    out3 = jax.block_until_ready(
        informer_data_embedding(x_bf16, w_bf16, pe=pe3, out_dtype=jnp.bfloat16))
    ref3 = reference(x_bf16.astype(jnp.float32), w_bf16.astype(jnp.float32), pe3)
    assert out3.shape == (B, L, d3)
    assert jnp.allclose(out3.astype(jnp.float32), ref3, atol=5e-2, rtol=5e-2)

    print("KERNEL_OK")
</pallas_src>

<mosaic_0001>
module attributes {stable_mosaic.version = 11 : i64} {
  func.func @data_embedding_kernel(%arg0: i32, %arg1: memref<16x7xf32, #tpu.memory_space<vmem>>, %arg2: memref<3x7x32xf32, #tpu.memory_space<vmem>>, %arg3: memref<16x32xf32, #tpu.memory_space<vmem>>, %arg4: memref<1x16x32xf32, #tpu.memory_space<vmem>>) attributes {dimension_semantics = [#tpu.dimension_semantics<parallel>], iteration_bounds = array<i64: 5>, scalar_prefetch = 0 : i64, scratch_operands = 0 : i64, tpu.core_type = #tpu.core_type<tc>, window_params = [{transform_indices = @transform_0, window_bounds = array<i64: 16, 7>}, {pipeline_mode = #tpu.pipeline_mode<synchronous>, transform_indices = @transform_1, window_bounds = array<i64: 3, 7, 32>}, {pipeline_mode = #tpu.pipeline_mode<synchronous>, transform_indices = @transform_2, window_bounds = array<i64: 16, 32>}, {transform_indices = @transform_3, window_bounds = array<i64: 1, 16, 32>}]} {
    %c0 = arith.constant 0 : index
    %c0_0 = arith.constant 0 : index
    %0 = vector.load %arg1[%c0, %c0_0] : memref<16x7xf32, #tpu.memory_space<vmem>>, vector<16x7xf32>
    %c1_i32 = arith.constant 1 : i32
    %1 = tpu.dynamic_rotate %0 by %c1_i32 dim 0 : vector<16x7xf32>, i32 -> vector<16x7xf32>
    %c15_i32 = arith.constant 15 : i32
    %2 = tpu.dynamic_rotate %0 by %c15_i32 dim 0 : vector<16x7xf32>, i32 -> vector<16x7xf32>
    %c1_i32_1 = arith.constant 1 : i32
    %3 = tpu.dynamic_rotate %0 by %c1_i32_1 dim 0 : vector<16x7xf32>, i32 -> vector<16x7xf32>
    %c15_i32_2 = arith.constant 15 : i32
    %4 = tpu.dynamic_rotate %0 by %c15_i32_2 dim 0 : vector<16x7xf32>, i32 -> vector<16x7xf32>
    %5 = tpu.iota {dimensions = array<i32: 1>} : vector<1x16x7xi32>
    %6 = vector.shape_cast %5 : vector<1x16x7xi32> to vector<16x7xi32>
    %c0_i32 = arith.constant 0 : i32
    %7 = vector.broadcast %c0_i32 : i32 to vector<16x7xi32>
    %8 = arith.cmpi eq, %6, %7 : vector<16x7xi32>
    %9 = arith.select %8, %3, %1 : vector<16x7xi1>, vector<16x7xf32>
    %c15_i32_3 = arith.constant 15 : i32
    %10 = vector.broadcast %c15_i32_3 : i32 to vector<16x7xi32>
    %11 = arith.cmpi eq, %6, %10 : vector<16x7xi32>
    %12 = arith.select %11, %4, %2 : vector<16x7xi1>, vector<16x7xf32>
    %c0_4 = arith.constant 0 : index
    %c0_5 = arith.constant 0 : index
    %c0_6 = arith.constant 0 : index
    %13 = vector.load %arg2[%c0_4, %c0_5, %c0_6] : memref<3x7x32xf32, #tpu.memory_space<vmem>>, vector<1x7x32xf32>
    %14 = vector.shape_cast %13 : vector<1x7x32xf32> to vector<7x32xf32>
    %cst = arith.constant dense<0.000000e+00> : vector<16x32xf32>
    %15 = tpu.matmul %9, %14, %cst {dimension_numbers = #tpu.dot_dimension_numbers<[1], [0], [0], [1], [0, 0, 1, 1], [], []>} : vector<16x7xf32>, vector<7x32xf32>, vector<16x32xf32> -> vector<16x32xf32>
    %c1 = arith.constant 1 : index
    %c0_7 = arith.constant 0 : index
    %c0_8 = arith.constant 0 : index
    %16 = vector.load %arg2[%c1, %c0_7, %c0_8] : memref<3x7x32xf32, #tpu.memory_space<vmem>>, vector<1x7x32xf32>
    %17 = vector.shape_cast %16 : vector<1x7x32xf32> to vector<7x32xf32>
    %cst_9 = arith.constant dense<0.000000e+00> : vector<16x32xf32>
    %18 = tpu.matmul %0, %17, %cst_9 {dimension_numbers = #tpu.dot_dimension_numbers<[1], [0], [0], [1], [0, 0, 1, 1], [], []>} : vector<16x7xf32>, vector<7x32xf32>, vector<16x32xf32> -> vector<16x32xf32>
    %19 = arith.addf %15, %18 : vector<16x32xf32>
    %c2 = arith.constant 2 : index
    %c0_10 = arith.constant 0 : index
    %c0_11 = arith.constant 0 : index
    %20 = vector.load %arg2[%c2, %c0_10, %c0_11] : memref<3x7x32xf32, #tpu.memory_space<vmem>>, vector<1x7x32xf32>
    %21 = vector.shape_cast %20 : vector<1x7x32xf32> to vector<7x32xf32>
    %cst_12 = arith.constant dense<0.000000e+00> : vector<16x32xf32>
    %22 = tpu.matmul %12, %21, %cst_12 {dimension_numbers = #tpu.dot_dimension_numbers<[1], [0], [0], [1], [0, 0, 1, 1], [], []>} : vector<16x7xf32>, vector<7x32xf32>, vector<16x32xf32> -> vector<16x32xf32>
    %23 = arith.addf %19, %22 : vector<16x32xf32>
    %24 = vector.shape_cast %23 : vector<16x32xf32> to vector<1x16x32xf32>
    %c0_13 = arith.constant 0 : index
    %c0_14 = arith.constant 0 : index
    %25 = vector.load %arg3[%c0_13, %c0_14] : memref<16x32xf32, #tpu.memory_space<vmem>>, vector<16x32xf32>
    %26 = vector.shape_cast %25 : vector<16x32xf32> to vector<1x16x32xf32>
    %27 = arith.addf %24, %26 : vector<1x16x32xf32>
    %c0_15 = arith.constant 0 : index
    %c0_16 = arith.constant 0 : index
    %c0_17 = arith.constant 0 : index
    %28 = vector.load %arg4[%c0_15, %c0_16, %c0_17] : memref<1x16x32xf32, #tpu.memory_space<vmem>>, vector<1x16x32xf32>
    tpu.vector_store %arg4[%c0_15, %c0_16, %c0_17], %27 {strides = array<i32>} : memref<1x16x32xf32, #tpu.memory_space<vmem>>, vector<1x16x32xf32>,
    return
  }
  func.func @transform_0(%arg0: i32) -> (i32, i32) {
    %c0_i32 = arith.constant 0 : i32
    %c0_i32_0 = arith.constant 0 : i32
    return %arg0, %c0_i32 : i32, i32
  }
  func.func @transform_1(%arg0: i32) -> (i32, i32, i32) {
    %c0_i32 = arith.constant 0 : i32
    %c0_i32_0 = arith.constant 0 : i32
    %c0_i32_1 = arith.constant 0 : i32
    %c0_i32_2 = arith.constant 0 : i32
    return %c0_i32, %c0_i32_0, %c0_i32_1 : i32, i32, i32
  }
  func.func @transform_2(%arg0: i32) -> (i32, i32) {
    %c0_i32 = arith.constant 0 : i32
    %c0_i32_0 = arith.constant 0 : i32
    %c0_i32_1 = arith.constant 0 : i32
    return %c0_i32, %c0_i32_0 : i32, i32
  }
  func.func @transform_3(%arg0: i32) -> (i32, i32, i32) {
    %c0_i32 = arith.constant 0 : i32
    %c0_i32_0 = arith.constant 0 : i32
    %c0_i32_1 = arith.constant 0 : i32
    return %arg0, %c0_i32, %c0_i32_0 : i32, i32, i32
  }
}

</mosaic_0001>

<llo_original>
// kernel: tpu_custom_call.1
$region0: #{tpu_custom_call.1}
  #allocation0 [shape = 'u32[]', space=smem, size = 0x4, offset = 0x4, fixed_abs, tag = 'smem constant byte address 0x4 - core index']
  #allocation1 [shape = 'u32[144,128]{1,0:T(1,128)}', space=vmem, size = 0x12000, scoped, tag = 'internal scratch']
  %s0 = inlined_call_operand.vmem [shape: f32[80,7], index: 0, kind: input, shape index: {}]
  %s1 = inlined_call_operand.vmem [shape: f32[3,7,32], index: 1, kind: input, shape index: {}]
  %s2 = inlined_call_operand.vmem [shape: f32[16,32], index: 2, kind: input, shape index: {}]
  %s3 = inlined_call_operand.hbm [shape: f32[5,16,32], index: 3, kind: output, shape index: {}]
  %s4 = sld [smem:[#allocation0]]
  $region45: #{tpu_custom_call.1} parent=0
    _
  %s6 = ssub.s32 1, %s4
  %s7 = scalar_select 0, %s6, %s4
  $region1: #{tpu_custom_call.1} parent=0
    #allocation2 [shape = 'u8[16384]{0}', space=vmem, size = 0x4000, scoped, tag = 'output window, operand 0']
    #allocation3 [shape = 's32[2]{0}', space=sflag, size = 0x8, scoped, tag = 'scoped memory for tpu_custom_call.1']
    %8 = vsyncpa [#allocation3], 0
    %s9 = scalar_lea.sflag [#allocation3], 1
    %10 = vsyncpa %s9, 0
    loop: start=0, step=1, limit=7
    $region2: #{tpu_custom_call.1} parent=1 // loop_pre_header
      _
    $region3: #{tpu_custom_call.1} parent=1 // loop_header
      %s12 = sphi 0, %s16
      %p13 = scmp.ge.s32.totalorder %s12, 7
      %s22 = sphi 0, %s24
      %s25 = sphi 0, %s22
      %s26 = sphi 0, %s25
      %s42 = sphi 0, %s26
      %s46 = sphi 0, %s46
      %s48 = sphi 0, %s46
      %s49 = sphi 0, %s48
      %s63 = sphi 0, %s49
      %s67 = sphi 0, %s67
      %s69 = sphi 0, %s67
      %s70 = sphi 0, %s69
      %s84 = sphi 0, %s70
      %s90 = sphi 0, %s92
      %s93 = sphi 0, %s90
      %s94 = sphi 0, %s93
      %s110 = sphi 0, %s94
    $region4: #{tpu_custom_call.1} parent=1 // loop_header_branch
      %15 = sbr.rel (%p13) target = $region8
    $region5: #{tpu_custom_call.1} parent=1 // loop_body
      %s17 = ssub.s32 %s12, 1
      %s18 = ssub.s32 %s12, 2
      %s19 = sadd.s32 %s12, 1
      %s20 = ssub.s32 %s12, %s19
      %p21 = scmp.eq.s32.totalorder %s20, 0
      %s23 = sadd.s32 %s22, 1
      %s24 = scalar_select %p21, %s22, %s23
      %p27 = pneg %p21
      %p28 = scmp.eq.s32.totalorder %s12, 4
      %p29 = por %p27, %p28
      %p30 = scmp.ne.s32.totalorder %s22, %s25
      %p31 = scmp.eq.s32.totalorder %s12, 0
      %p32 = por %p30, %p31
      %p33 = scmp.ne.s32.totalorder %s22, %s25
      %p34 = scmp.eq.s32.totalorder %s17, 4
      %p35 = por %p33, %p34
      %p36 = scmp.ne.s32.totalorder %s25, %s26
      %p37 = scmp.eq.s32.totalorder %s17, 0
      %p38 = por %p36, %p37
      %p39 = scmp.ne.s32.totalorder %s25, %s26
      %p40 = scmp.eq.s32.totalorder %s18, 4
      %p41 = por %p39, %p40
      %p43 = scmp.ne.s32.totalorder %s26, %s42
      %p44 = scmp.eq.s32.totalorder %s18, 0
      %p45 = por %p43, %p44
      %s47 = sadd.s32 %s46, 1
      %p50 = scmp.eq.s32.totalorder %s12, 4
      %p51 = scmp.ne.s32.totalorder %s46, %s48
      %p52 = scmp.eq.s32.totalorder %s12, 0
      %p53 = por %p51, %p52
      %p54 = scmp.ne.s32.totalorder %s46, %s48
      %p55 = scmp.eq.s32.totalorder %s17, 4
      %p56 = por %p54, %p55
      %p57 = scmp.ne.s32.totalorder %s48, %s49
      %p58 = scmp.eq.s32.totalorder %s17, 0
      %p59 = por %p57, %p58
      %p60 = scmp.ne.s32.totalorder %s48, %s49
      %p61 = scmp.eq.s32.totalorder %s18, 4
      %p62 = por %p60, %p61
      %p64 = scmp.ne.s32.totalorder %s49, %s63
      %p65 = scmp.eq.s32.totalorder %s18, 0
      %p66 = por %p64, %p65
      %s68 = sadd.s32 %s67, 1
      %p71 = scmp.eq.s32.totalorder %s12, 4
      %p72 = scmp.ne.s32.totalorder %s67, %s69
      %p73 = scmp.eq.s32.totalorder %s12, 0
      %p74 = por %p72, %p73
      %p75 = scmp.ne.s32.totalorder %s67, %s69
      %p76 = scmp.eq.s32.totalorder %s17, 4
      %p77 = por %p75, %p76
      %p78 = scmp.ne.s32.totalorder %s69, %s70
      %p79 = scmp.eq.s32.totalorder %s17, 0
      %p80 = por %p78, %p79
      %p81 = scmp.ne.s32.totalorder %s69, %s70
      %p82 = scmp.eq.s32.totalorder %s18, 4
      %p83 = por %p81, %p82
      %p85 = scmp.ne.s32.totalorder %s70, %s84
      %p86 = scmp.eq.s32.totalorder %s18, 0
      %p87 = por %p85, %p86
      %s88 = ssub.s32 %s12, %s19
      %p89 = scmp.eq.s32.totalorder %s88, 0
      %s91 = sadd.s32 %s90, 1
      %s92 = scalar_select %p89, %s90, %s91
      %p95 = pneg %p89
      %p96 = scmp.eq.s32.totalorder %s12, 4
      %p97 = por %p95, %p96
      %p98 = scmp.ne.s32.totalorder %s90, %s93
      %p99 = scmp.eq.s32.totalorder %s12, 0
      %p100 = por %p98, %p99
      %p101 = scmp.ne.s32.totalorder %s90, %s93
      %p102 = scmp.eq.s32.totalorder %s17, 4
      %p103 = por %p101, %p102
      %p104 = scmp.ne.s32.totalorder %s93, %s94
      %p105 = scmp.eq.s32.totalorder %s17, 0
      %p106 = por %p104, %p105
      %p107 = scmp.ne.s32.totalorder %s93, %s94
      %p108 = scmp.eq.s32.totalorder %s18, 4
      %p109 = por %p107, %p108
      %p111 = scmp.ne.s32.totalorder %s94, %s110
      %p112 = scmp.eq.s32.totalorder %s18, 0
      %p113 = por %p111, %p112
      %p114 = scmp.le.s32.totalorder 1, %s12
      %p115 = scmp.lt.s32.totalorder %s12, 6
      %p116 = pnand %p114, %p115
      %p117 = pneg %p116
      // Predicated region
      $region9: #{tpu_custom_call.1} parent=5 // pred_check
        _
      $region10: #{tpu_custom_call.1} parent=5 // pred_check_branch
        %119 = sbr.rel (%p116) target = $region12
      $region11: #{tpu_custom_call.1} parent=5 // pred_region
        %s120 = ssub.s32 %s12, 1
        // Predicated region
        $region13: #{tpu_custom_call.1} parent=11 // pred_check
          %p121 = pneg %p59
        $region14: #{tpu_custom_call.1} parent=11 // pred_check_branch
          %123 = sbr.rel (%p121) target = $region16
        $region15: #{tpu_custom_call.1} parent=11 // pred_region
          _
        $region16: #{tpu_custom_call.1} parent=11 // pred_fallthru
          _
        // Predicated region
        $region17: #{tpu_custom_call.1} parent=11 // pred_check
          %p124 = pneg %p80
        $region18: #{tpu_custom_call.1} parent=11 // pred_check_branch
          %126 = sbr.rel (%p124) target = $region20
        $region19: #{tpu_custom_call.1} parent=11 // pred_region
          _
        $region20: #{tpu_custom_call.1} parent=11 // pred_fallthru
          _
      $region12: #{tpu_custom_call.1} parent=5 // pred_fallthru
        _
      %p127 = scmp.lt.s32.totalorder %s12, 5
      // Predicated region
      $region21: #{tpu_custom_call.1} parent=5 // pred_check
        %p128 = pneg %p127
      $region22: #{tpu_custom_call.1} parent=5 // pred_check_branch
        %130 = sbr.rel (%p128) target = $region24
      $region23: #{tpu_custom_call.1} parent=5 // pred_region
        // Predicated region
        $region25: #{tpu_custom_call.1} parent=23 // pred_check
          %p131 = pneg %p32
        $region26: #{tpu_custom_call.1} parent=23 // pred_check_branch
          %133 = sbr.rel (%p131) target = $region28
        $region27: #{tpu_custom_call.1} parent=23 // pred_region
          %s134 = smul.u32 2, %s12
          %p135 = scmp.lt.s32.totalorder %s134, 9
          %s136 = scalar_select %p135, %s134, 9
          %s137 = smul.addr %s136, 8
          %s138 = scalar_lea.vmem %s0, %s137
          %s139 = smul.u32 2, %s12
        $region28: #{tpu_custom_call.1} parent=23 // pred_fallthru
          _
      $region24: #{tpu_custom_call.1} parent=5 // pred_fallthru
        _
      %p140 = scmp.le.s32.totalorder 1, %s12
      %p141 = scmp.lt.s32.totalorder %s12, 6
      %p142 = pnand %p140, %p141
      %p143 = pneg %p142
      // Predicated region
      $region29: #{tpu_custom_call.1} parent=5 // pred_check
        _
      $region30: #{tpu_custom_call.1} parent=5 // pred_check_branch
        %145 = sbr.rel (%p142) target = $region32
      $region31: #{tpu_custom_call.1} parent=5 // pred_region
        %s146 = ssub.s32 %s12, 1
        %s147 = smul.u32 2, %s17
        %p148 = scmp.lt.s32.totalorder %s147, 9
        %s149 = scalar_select %p148, %s147, 9
        %s150 = smul.addr %s149, 8
        %s151 = scalar_lea.vmem %s0, %s150
        %p152 = pneg %p38
        %p153 = pneg %p35
        %p154 = pneg %p59
        %p155 = pneg %p56
        %p156 = pneg %p80
        %p157 = pneg %p77
        %p158 = pneg %p106
        %p159 = pneg %p103
        %s160 = sand.u32 %s93, 1
        %s161 = scalar_lea.sflag [#allocation3], %s160
        %s162 = sand.u32 %s93, 1
        %s163 = smul.addr %s162, 16
        %s164 = scalar_lea.vmem [#allocation2], %s163
        %s165 = smul.u32 2, %s17
        %p166 = scmp.lt.s32.totalorder %s165, 9
        %s167 = scalar_select %p166, %s165, 9
        %s168 = smul.addr %s167, 8
        %s169 = scalar_lea.vmem %s0, %s168
        %s170 = smul.u32 2, %s17
        %v171 = vld [vmem:[%s169] sm:$0xff]
        %v172 = vld [vmem:[%s169 + $0x8] sm:$0xff]
        %v173 = vrot.slane %v171, 7
        %v174 = vrot.slane %v172, 7
        %v175 = vlaneseq
        %v176 = vshrl.u32 %v175, 7
        %vm177 = vcmp.lt.s32.totalorder %v176, 1
        %v178 = vsel %vm177, %v173, %v174
        %v179 = vsel %vm177, %v174, %v173
        %v180 = vrot.slane %v171, 1
        %v181 = vrot.slane %v172, 1
        %vm182 = vcmp.lt.s32.totalorder %v176, 7
        %v183 = vsel %vm182, %v180, %v181
        %v184 = vsel %vm182, %v181, %v180
        %v185 = vld [vmem:[%s1] sm:$0x7f]
        %s186 = scalar_lea.vmem %s1, 8
        %v187 = vld [vmem:[%s186] sm:$0x7f]
        %vm188 = vcmask 56320
        %v190 = vsel %vm188, %v171, 0
        %v193 = vsel %vm188, %v172, 0
        %vm195 = vcmask 1046528
        %v197 = vsel %vm195, %v187, 0
        %199 = vmatprep.subr.mxu0 0.0
        %200 = vmatpush1.msra.mxu0 %v197
        %201 = vmatprep.subr.mxu0 0.0
        %202 = vmatpush1.msra.mxu0 0.0
        %203 = vmatprep.subr.mxu0 0.0
        %204 = vmatpush1.msra.mxu0 0.0
        %205 = vmatprep.subr.mxu0 0.0
        %206 = vmatpush1.msra.mxu0 0.0
        %207 = vmatprep.subr.mxu0 0.0
        %208 = vmatpush1.msra.mxu0 0.0
        %209 = vmatprep.subr.mxu0 0.0
        %210 = vmatpush1.msra.mxu0 0.0
        %211 = vmatprep.subr.mxu0 0.0
        %212 = vmatpush1.msra.mxu0 0.0
        %213 = vmatprep.subr.mxu0 0.0
        %214 = vmatpush1.msra.mxu0 0.0
        %215 = vmatprep.subr.mxu0 0.0
        %216 = vmatpush1.msra.mxu0 0.0
        %217 = vmatprep.subr.mxu0 0.0
        %218 = vmatpush1.msra.mxu0 0.0
        %219 = vmatprep.subr.mxu0 0.0
        %220 = vmatpush1.msra.mxu0 0.0
        %221 = vmatprep.subr.mxu0 0.0
        %222 = vmatpush1.msra.mxu0 0.0
        %223 = vmatprep.subr.mxu0 0.0
        %224 = vmatpush1.msra.mxu0 0.0
        %225 = vmatprep.subr.mxu0 0.0
        %226 = vmatpush1.msra.mxu0 0.0
        %227 = vmatprep.subr.mxu0 0.0
        %228 = vmatpush1.msra.mxu0 0.0
        %229 = vmatprep.subr.mxu0 0.0
        %230 = vmatpush1.msra.mxu0 0.0
        %231 = vmatprep.subr.mxu0 0.0
        %232 = vmatpush1.msra.mxu0 0.0
        %233 = vmatprep.subr.mxu0 0.0
        %234 = vmatpush1.msra.mxu0 0.0
        %235 = vmatprep.subr.mxu0 0.0
        %236 = vmatpush1.msra.mxu0 0.0
        %237 = vmatprep.subr.mxu0 0.0
        %238 = vmatpush1.msra.mxu0 0.0
        %239 = vmatprep.subr.mxu0 0.0
        %240 = vmatpush1.msra.mxu0 0.0
        %241 = vmatprep.subr.mxu0 0.0
        %242 = vmatpush1.msra.mxu0 0.0
        %243 = vmatprep.subr.mxu0 0.0
        %244 = vmatpush1.msra.mxu0 0.0
        %245 = vmatprep.subr.mxu0 0.0
        %246 = vmatpush1.msra.mxu0 0.0
        %247 = vmatprep.subr.mxu0 0.0
        %248 = vmatpush1.msra.mxu0 0.0
        %249 = vmatprep.subr.mxu0 0.0
        %250 = vmatpush1.msra.mxu0 0.0
        %251 = vmatprep.subr.mxu0 0.0
        %252 = vmatpush1.msra.mxu0 0.0
        %253 = vmatprep.subr.mxu0 0.0
        %254 = vmatpush1.msra.mxu0 0.0
        %255 = vmatprep.subr.mxu0 0.0
        %256 = vmatpush1.msra.mxu0 0.0
        %257 = vmatprep.subr.mxu0 0.0
        %258 = vmatpush1.msra.mxu0 0.0
        %259 = vmatprep.subr.mxu0 0.0
        %260 = vmatpush1.msra.mxu0 0.0
        %261 = vmatprep.subr.mxu0 0.0
        %262 = vmatpush1.msra.mxu0 0.0
        %263 = vmatprep.mubr.f32.mxu0 0.0
        %264 = vmatmul.mubr.f32.gmra.mrb[0].mxu0 %v190
        %v265 = vpop.f32.mrb[0].mxu0
        %v266 = vadd.f32 0.0, %v265
        %v267 = vpop.f32.mrb[0].mxu0
        %268 = vmatprep.mubr.f32.mxu0 0.0
        %269 = vmatmul.mubr.f32.gmra.mrb[0].mxu0 %v193
        %v270 = vpop.f32.mrb[0].mxu0
        %v271 = vadd.f32 0.0, %v270
        %v272 = vpop.f32.mrb[0].mxu0
        %273 = vdwg.mxu0
        %v275 = vsel %vm188, %v179, 0
        %v278 = vsel %vm188, %v178, 0
        %v281 = vsel %vm195, %v185, 0
        %283 = vmatprep.subr.mxu0 0.0
        %284 = vmatpush1.msra.mxu0 %v281
        %285 = vmatprep.subr.mxu0 0.0
        %286 = vmatpush1.msra.mxu0 0.0
        %287 = vmatprep.subr.mxu0 0.0
        %288 = vmatpush1.msra.mxu0 0.0
        %289 = vmatprep.subr.mxu0 0.0
        %290 = vmatpush1.msra.mxu0 0.0
        %291 = vmatprep.subr.mxu0 0.0
        %292 = vmatpush1.msra.mxu0 0.0
        %293 = vmatprep.subr.mxu0 0.0
        %294 = vmatpush1.msra.mxu0 0.0
        %295 = vmatprep.subr.mxu0 0.0
        %296 = vmatpush1.msra.mxu0 0.0
        %297 = vmatprep.subr.mxu0 0.0
        %298 = vmatpush1.msra.mxu0 0.0
        %299 = vmatprep.subr.mxu0 0.0
        %300 = vmatpush1.msra.mxu0 0.0
        %301 = vmatprep.subr.mxu0 0.0
        %302 = vmatpush1.msra.mxu0 0.0
        %303 = vmatprep.subr.mxu0 0.0
        %304 = vmatpush1.msra.mxu0 0.0
        %305 = vmatprep.subr.mxu0 0.0
        %306 = vmatpush1.msra.mxu0 0.0
        %307 = vmatprep.subr.mxu0 0.0
        %308 = vmatpush1.msra.mxu0 0.0
        %309 = vmatprep.subr.mxu0 0.0
        %310 = vmatpush1.msra.mxu0 0.0
        %311 = vmatprep.subr.mxu0 0.0
        %312 = vmatpush1.msra.mxu0 0.0
        %313 = vmatprep.subr.mxu0 0.0
        %314 = vmatpush1.msra.mxu0 0.0
        %315 = vmatprep.subr.mxu0 0.0
        %316 = vmatpush1.msra.mxu0 0.0
        %317 = vmatprep.subr.mxu0 0.0
        %318 = vmatpush1.msra.mxu0 0.0
        %319 = vmatprep.subr.mxu0 0.0
        %320 = vmatpush1.msra.mxu0 0.0
        %321 = vmatprep.subr.mxu0 0.0
        %322 = vmatpush1.msra.mxu0 0.0
        %323 = vmatprep.subr.mxu0 0.0
        %324 = vmatpush1.msra.mxu0 0.0
        %325 = vmatprep.subr.mxu0 0.0
        %326 = vmatpush1.msra.mxu0 0.0
        %327 = vmatprep.subr.mxu0 0.0
        %328 = vmatpush1.msra.mxu0 0.0
        %329 = vmatprep.subr.mxu0 0.0
        %330 = vmatpush1.msra.mxu0 0.0
        %331 = vmatprep.subr.mxu0 0.0
        %332 = vmatpush1.msra.mxu0 0.0
        %333 = vmatprep.subr.mxu0 0.0
        %334 = vmatpush1.msra.mxu0 0.0
        %335 = vmatprep.subr.mxu0 0.0
        %336 = vmatpush1.msra.mxu0 0.0
        %337 = vmatprep.subr.mxu0 0.0
        %338 = vmatpush1.msra.mxu0 0.0
        %339 = vmatprep.subr.mxu0 0.0
        %340 = vmatpush1.msra.mxu0 0.0
        %341 = vmatprep.subr.mxu0 0.0
        %342 = vmatpush1.msra.mxu0 0.0
        %343 = vmatprep.subr.mxu0 0.0
        %344 = vmatpush1.msra.mxu0 0.0
        %345 = vmatprep.subr.mxu0 0.0
        %346 = vmatpush1.msra.mxu0 0.0
        %347 = vmatprep.mubr.f32.mxu0 0.0
        %348 = vmatmul.mubr.f32.gmra.mrb[0].mxu0 %v275
        %v349 = vpop.f32.mrb[0].mxu0
        %v350 = vadd.f32 %v266, %v349
        %v351 = vpop.f32.mrb[0].mxu0
        %352 = vmatprep.mubr.f32.mxu0 0.0
        %353 = vmatmul.mubr.f32.gmra.mrb[0].mxu0 %v278
        %v354 = vpop.f32.mrb[0].mxu0
        %v355 = vadd.f32 %v271, %v354
        %v356 = vpop.f32.mrb[0].mxu0
        %357 = vdwg.mxu0
        %s358 = scalar_lea.vmem %s1, 16
        %v359 = vld [vmem:[%s358] sm:$0x7f]
        %v361 = vsel %vm188, %v183, 0
        %v364 = vsel %vm188, %v184, 0
        %v367 = vsel %vm195, %v359, 0
        %369 = vmatprep.subr.mxu0 0.0
        %370 = vmatpush1.msra.mxu0 %v367
        %371 = vmatprep.subr.mxu0 0.0
        %372 = vmatpush1.msra.mxu0 0.0
        %373 = vmatprep.subr.mxu0 0.0
        %374 = vmatpush1.msra.mxu0 0.0
        %375 = vmatprep.subr.mxu0 0.0
        %376 = vmatpush1.msra.mxu0 0.0
        %377 = vmatprep.subr.mxu0 0.0
        %378 = vmatpush1.msra.mxu0 0.0
        %379 = vmatprep.subr.mxu0 0.0
        %380 = vmatpush1.msra.mxu0 0.0
        %381 = vmatprep.subr.mxu0 0.0
        %382 = vmatpush1.msra.mxu0 0.0
        %383 = vmatprep.subr.mxu0 0.0
        %384 = vmatpush1.msra.mxu0 0.0
        %385 = vmatprep.subr.mxu0 0.0
        %386 = vmatpush1.msra.mxu0 0.0
        %387 = vmatprep.subr.mxu0 0.0
        %388 = vmatpush1.msra.mxu0 0.0
        %389 = vmatprep.subr.mxu0 0.0
        %390 = vmatpush1.msra.mxu0 0.0
        %391 = vmatprep.subr.mxu0 0.0
        %392 = vmatpush1.msra.mxu0 0.0
        %393 = vmatprep.subr.mxu0 0.0
        %394 = vmatpush1.msra.mxu0 0.0
        %395 = vmatprep.subr.mxu0 0.0
        %396 = vmatpush1.msra.mxu0 0.0
        %397 = vmatprep.subr.mxu0 0.0
        %398 = vmatpush1.msra.mxu0 0.0
        %399 = vmatprep.subr.mxu0 0.0
        %400 = vmatpush1.msra.mxu0 0.0
        %401 = vmatprep.subr.mxu0 0.0
        %402 = vmatpush1.msra.mxu0 0.0
        %403 = vmatprep.subr.mxu0 0.0
        %404 = vmatpush1.msra.mxu0 0.0
        %405 = vmatprep.subr.mxu0 0.0
        %406 = vmatpush1.msra.mxu0 0.0
        %407 = vmatprep.subr.mxu0 0.0
        %408 = vmatpush1.msra.mxu0 0.0
        %409 = vmatprep.subr.mxu0 0.0
        %410 = vmatpush1.msra.mxu0 0.0
        %411 = vmatprep.subr.mxu0 0.0
        %412 = vmatpush1.msra.mxu0 0.0
        %413 = vmatprep.subr.mxu0 0.0
        %414 = vmatpush1.msra.mxu0 0.0
        %415 = vmatprep.subr.mxu0 0.0
        %416 = vmatpush1.msra.mxu0 0.0
        %417 = vmatprep.subr.mxu0 0.0
        %418 = vmatpush1.msra.mxu0 0.0
        %419 = vmatprep.subr.mxu0 0.0
        %420 = vmatpush1.msra.mxu0 0.0
        %421 = vmatprep.subr.mxu0 0.0
        %422 = vmatpush1.msra.mxu0 0.0
        %423 = vmatprep.subr.mxu0 0.0
        %424 = vmatpush1.msra.mxu0 0.0
        %425 = vmatprep.subr.mxu0 0.0
        %426 = vmatpush1.msra.mxu0 0.0
        %427 = vmatprep.subr.mxu0 0.0
        %428 = vmatpush1.msra.mxu0 0.0
        %429 = vmatprep.subr.mxu0 0.0
        %430 = vmatpush1.msra.mxu0 0.0
        %431 = vmatprep.subr.mxu0 0.0
        %432 = vmatpush1.msra.mxu0 0.0
        %433 = vmatprep.mubr.f32.mxu0 0.0
        %434 = vmatmul.mubr.f32.gmra.mrb[0].mxu0 %v361
        %v435 = vpop.f32.mrb[0].mxu0
        %v436 = vadd.f32 0.0, %v435
        %v437 = vpop.f32.mrb[0].mxu0
        %438 = vmatprep.mubr.f32.mxu0 0.0
        %439 = vmatmul.mubr.f32.gmra.mrb[0].mxu0 %v364
        %v440 = vpop.f32.mrb[0].mxu0
        %v441 = vadd.f32 0.0, %v440
        %v442 = vpop.f32.mrb[0].mxu0
        %443 = vdwg.mxu0
        %v444 = vadd.f32 %v350, %v436
        %v445 = vadd.f32 %v355, %v441
        %v446 = vld [vmem:[%s2] sm:$0xff]
        %v447 = vld [vmem:[%s2 + $0x8] sm:$0xff]
        %v448 = vadd.f32 %v444, %v446
        %v449 = vadd.f32 %v445, %v447
        %vm450 = vcmask 261120
        %451 = vst.msk [vmem:[%s164] sm:$0xff] %vm450, %v448
        %452 = vst.msk [vmem:[%s164 + $0x8] sm:$0xff] %vm450, %v449
        %s453 = sand.u32 %s93, 1
        %s454 = scalar_lea.sflag [#allocation3], %s453
        %s455 = sand.u32 %s93, 1
        %s456 = smul.addr %s455, 16
        %s457 = scalar_lea.vmem [#allocation2], %s456
        // Predicated region
        $region33: #{tpu_custom_call.1} parent=31 // pred_check
          %p458 = pneg %p103
        $region34: #{tpu_custom_call.1} parent=31 // pred_check_branch
          %460 = sbr.rel (%p458) target = $region36
        $region35: #{tpu_custom_call.1} parent=31 // pred_region
          %s462 = ssub.s32 256, 256
          %463 = vsyncadd %s454, %s462
          %s464 = smul.addr %s17, 2
          %s465 = smul.addr %s464, 128
          %s466 = scalar_lea.hbm %s3, %s465
          %s467 = sshll.u32 %s457, 4
          %s468 = int_to_ptr.vmem [resolvable:$true] %s467
          %473 = dma.vmem_to_hbm [thread:$0]  %s468, 256, %s466, %s454, 128, 128, 8
        $region36: #{tpu_custom_call.1} parent=31 // pred_fallthru
          _
      $region32: #{tpu_custom_call.1} parent=5 // pred_fallthru
        _
      %p474 = scmp.le.s32.totalorder 2, %s12
      // Predicated region
      $region37: #{tpu_custom_call.1} parent=5 // pred_check
        %p475 = pneg %p474
      $region38: #{tpu_custom_call.1} parent=5 // pred_check_branch
        %477 = sbr.rel (%p475) target = $region40
      $region39: #{tpu_custom_call.1} parent=5 // pred_region
        %s478 = ssub.s32 %s12, 2
        // Predicated region
        $region41: #{tpu_custom_call.1} parent=39 // pred_check
          %p479 = pneg %p109
        $region42: #{tpu_custom_call.1} parent=39 // pred_check_branch
          %481 = sbr.rel (%p479) target = $region44
        $region43: #{tpu_custom_call.1} parent=39 // pred_region
          %s482 = sand.u32 %s94, 1
          %s483 = scalar_lea.sflag [#allocation3], %s482
          %s484 = sand.u32 %s94, 1
          %s485 = smul.addr %s484, 16
          %s486 = scalar_lea.vmem [#allocation2], %s485
          %487 = dma.done %s483, 256
        $region44: #{tpu_custom_call.1} parent=39 // pred_fallthru
          _
      $region40: #{tpu_custom_call.1} parent=5 // pred_fallthru
        _
    $region6: #{tpu_custom_call.1} parent=1 // loop_footer
      %s16 = sadd.s32 1, %s12
    $region7: #{tpu_custom_call.1} parent=1 // loop_footer_branch
      %11 = sbr.rel target = $region3
    $region8: #{tpu_custom_call.1} parent=1 // loop_exit
      _
    %488 = vsyncpa [#allocation3], 1
    %s489 = scalar_lea.sflag [#allocation3], 1
    %490 = vsyncpa %s489, 1

</llo_original>
